<compile_context>
chip_gen: v7x
topology: tpu7x:2x2x1
jax: 0.10.0
libtpu: 0.0.40
codegen_flags: <defaults>
</compile_context>

<pallas_src>
import functools

import jax
import jax.numpy as jnp
from jax.experimental import pallas as pl
from jax.experimental.pallas import tpu as pltpu

_BN_EPS = 1e-5
_LANE = 128
_TN_CAP = 1024  # per-tile row cap; sized with big headroom for v7x 64 MiB VMEM


def _round_up(a, b):
    return ((a + b - 1) // b) * b


# ------------------------------ Pallas kernel --------------------------------

def _make_block_resnet_kernel(num_hidden):
    """num_hidden = num_layers - 1 (static)."""

    def kernel(x_ref, w0_ref, b0_ref, actg_ref, actb_ref,
               wh_ref, bh_ref, wskip_ref, bskip_ref, o_ref):
        x = x_ref[...]                                  # (TN, Din), matmul dtype
        mm_dtype = w0_ref.dtype

        # layer0: Linear(Din -> Dp); accumulate in f32, bias in f32
        y = jnp.dot(x, w0_ref[...], preferred_element_type=jnp.float32) + b0_ref[...]

        # activation_function (runs once, right after layer0 — see header)
        g = actg_ref[...]
        beta = actb_ref[...]
        # sigmoid(z) == 0.5*(tanh(z/2)+1): exact, stable, EUP tanh (no VALU divide)
        sig = 0.5 * (jnp.tanh(0.5 * (beta * y)) + 1.0)
        y = (g + sig * (1.0 - g)) * y

        # hidden stack: (Linear + eval-BatchNorm) folded into one matmul + bias
        for i in range(num_hidden):                     # static unroll (shallow)
            y = jnp.dot(y.astype(mm_dtype), wh_ref[i],
                        preferred_element_type=jnp.float32) + bh_ref[pl.ds(i, 1), :]

        # skip branch: bn(skip_layer(X)), also folded to one matmul + bias
        ys = jnp.dot(x, wskip_ref[...], preferred_element_type=jnp.float32) + bskip_ref[...]

        o_ref[...] = (y + ys).astype(o_ref.dtype)

    return kernel


# --------------------------- parameter preparation ---------------------------

def prepare_params(params, num_layers, matmul_dtype=jnp.bfloat16,
                   eps=_BN_EPS, lane=_LANE):
    """One-time prep (outside the jitted per-call path):
       * transpose torch-layout (out,in) weights to (in,out),
       * fold eval-mode BatchNorm and the Linear bias into weight/bias,
       * zero-pad the feature axis to 128 lanes (padded lanes stay exactly 0
         through every layer), stack hidden layers,
       * cast matmul operands to `matmul_dtype`; biases/activation stay f32."""
    d_out, d_in = params["w0"].shape
    d_pad = _round_up(d_out, lane)

    def pad_mat(a, rows, cols):
        a = jnp.asarray(a, jnp.float32)
        return jnp.pad(a, ((0, rows - a.shape[0]), (0, cols - a.shape[1])))

    def as_row(v):  # (out,) -> (1, d_pad), f32
        v = jnp.asarray(v, jnp.float32).reshape(1, -1)
        return jnp.pad(v, ((0, 0), (0, d_pad - v.shape[1])))

    def fold(w, b, pre):
        """Fold eval BN into the preceding Linear. Returns (in, out) weight and
        (out,) bias, unpadded, f32."""
        w = jnp.asarray(w, jnp.float32)                 # torch layout (out, in)
        b = jnp.asarray(b, jnp.float32)
        bn_w = jnp.asarray(params[pre + "_w"], jnp.float32)
        bn_b = jnp.asarray(params[pre + "_b"], jnp.float32)
        bn_m = jnp.asarray(params[pre + "_m"], jnp.float32)
        bn_v = jnp.asarray(params[pre + "_v"], jnp.float32)
        s = bn_w * jax.lax.rsqrt(bn_v + eps)
        return w.T * s[None, :], b * s + bn_b - bn_m * s

    # layer0 (no BN)
    w0p = pad_mat(jnp.asarray(params["w0"], jnp.float32).T, d_in, d_pad)

    # hidden layers (Linear + BN folded)
    num_hidden = num_layers - 1
    if num_hidden > 0:
        whs, bhs = [], []
        for i in range(1, num_layers):
            wt, bias = fold(params[f"w{i}"], params[f"b{i}"], f"bn{i}")
            whs.append(pad_mat(wt, d_pad, d_pad))
            bhs.append(as_row(bias))
        wh = jnp.stack(whs)
        bh = jnp.concatenate(bhs, axis=0)
    else:  # dummies; the in-kernel loop is skipped
        wh = jnp.zeros((1, d_pad, d_pad), jnp.float32)
        bh = jnp.zeros((1, d_pad), jnp.float32)

    # skip branch (Linear + BN folded)
    wts, bs = fold(params["wskip"], params["bskip"], "bnskip")
    wskip = pad_mat(wts, d_in, d_pad)

    return {
        "w0": w0p.astype(matmul_dtype), "b0": as_row(params["b0"]),
        "act_gamma": as_row(params["act_gamma"]), "act_beta": as_row(params["act_beta"]),
        "wh": wh.astype(matmul_dtype), "bh": bh,
        "wskip": wskip.astype(matmul_dtype), "bskip": as_row(bs),
    }


# --------------------------------- wrapper ------------------------------------

@functools.partial(jax.jit, static_argnames=("num_layers", "output_dim", "tile_n"))
def block_resnet_forward(x, kparams, *, num_layers, output_dim, tile_n=None):
    d_in, d_pad = kparams["w0"].shape
    num_hidden = num_layers - 1
    mm_dtype = kparams["w0"].dtype

    # Row tiling: multiple of 8, capped for v7x VMEM; pad rows so every store
    # is a full unmasked tile.
    n = x.shape[0]
    n8 = _round_up(max(n, 8), 8)
    tn = _round_up(tile_n, 8) if tile_n is not None else min(_TN_CAP, n8)
    n_pad = _round_up(n8, tn)
    xp = x.astype(mm_dtype)
    if n_pad != n:
        xp = jnp.pad(xp, ((0, n_pad - n), (0, 0)))

    args = (xp, kparams["w0"], kparams["b0"],
            kparams["act_gamma"], kparams["act_beta"],
            kparams["wh"], kparams["bh"],
            kparams["wskip"], kparams["bskip"])

    const2 = lambda i: (0, 0)
    const3 = lambda i: (0, 0, 0)
    in_specs = [
        pl.BlockSpec((tn, d_in), lambda i: (i, 0)),                 # x (tiled over N)
        pl.BlockSpec(kparams["w0"].shape, const2),                  # weights: resident
        pl.BlockSpec(kparams["b0"].shape, const2),
        pl.BlockSpec(kparams["act_gamma"].shape, const2),
        pl.BlockSpec(kparams["act_beta"].shape, const2),
        pl.BlockSpec(kparams["wh"].shape, const3),
        pl.BlockSpec(kparams["bh"].shape, const2),
        pl.BlockSpec(kparams["wskip"].shape, const2),
        pl.BlockSpec(kparams["bskip"].shape, const2),
    ]

    out = pl.pallas_call(
        _make_block_resnet_kernel(num_hidden),
        out_shape=jax.ShapeDtypeStruct((n_pad, d_pad), jnp.float32),
        grid=(n_pad // tn,),
        in_specs=in_specs,
        out_specs=pl.BlockSpec((tn, d_pad), lambda i: (i, 0)),
        compiler_params=pltpu.CompilerParams(
            dimension_semantics=("parallel",)),       # megacore-shardable on v7x
    )(*args)

    # Semantic-fidelity slice. For large N, consumers may take the padded
    # (n_pad, 128) buffer directly to avoid this extra HBM copy.
    return out[:n, :output_dim]


# ----------------------------- pure-JAX reference -----------------------------

def reference_forward(x, params, num_layers, eps=_BN_EPS):
    def linear(z, w, b):
        return z @ w.T + b

    def activation(z, g, beta):
        return (g + jax.nn.sigmoid(beta * z) * (1.0 - g)) * z

    def bn_eval(z, w, b, m, v):
        return (z - m) / jnp.sqrt(v + eps) * w + b

    y = activation(linear(x, params["w0"], params["b0"]),
                   params["act_gamma"], params["act_beta"])
    for i in range(1, num_layers):
        y = linear(y, params[f"w{i}"], params[f"b{i}"])
        y = bn_eval(y, params[f"bn{i}_w"], params[f"bn{i}_b"],
                    params[f"bn{i}_m"], params[f"bn{i}_v"])
    ys = bn_eval(linear(x, params["wskip"], params["bskip"]),
                 params["bnskip_w"], params["bnskip_b"],
                 params["bnskip_m"], params["bnskip_v"])
    return y + ys


# ----------------------------------- main --------------------------------------

if __name__ == "__main__":
    IN_DIM, OUT_DIM, NUM_LAYERS = 32, 32, 3   # skip_connection=True

    key = jax.random.PRNGKey(0)
    ks = iter(jax.random.split(key, 48))
    s = 0.1

    def rnd(shape, scale=s):
        return jax.random.normal(next(ks), shape, jnp.float32) * scale

    params = {
        "w0": rnd((OUT_DIM, IN_DIM)), "b0": rnd((OUT_DIM,)),
        "act_gamma": rnd((OUT_DIM,), 1.0), "act_beta": rnd((OUT_DIM,), 1.0),
        "wskip": rnd((OUT_DIM, IN_DIM)), "bskip": rnd((OUT_DIM,)),
        "bnskip_w": 1.0 + rnd((OUT_DIM,)), "bnskip_b": rnd((OUT_DIM,)),
        "bnskip_m": rnd((OUT_DIM,)), "bnskip_v": 1.0 + jnp.abs(rnd((OUT_DIM,))),
    }
    for i in range(1, NUM_LAYERS):
        params[f"w{i}"] = rnd((OUT_DIM, OUT_DIM))
        params[f"b{i}"] = rnd((OUT_DIM,))
        params[f"bn{i}_w"] = 1.0 + rnd((OUT_DIM,))
        params[f"bn{i}_b"] = rnd((OUT_DIM,))
        params[f"bn{i}_m"] = rnd((OUT_DIM,))
        params[f"bn{i}_v"] = 1.0 + jnp.abs(rnd((OUT_DIM,)))

    # ---- check 1: float32 matmul path (v5e-style), tight tolerance -----------
    N1 = 16
    x1 = jax.random.normal(next(ks), (N1, IN_DIM), jnp.float32)
    kp_f32 = prepare_params(params, NUM_LAYERS, matmul_dtype=jnp.float32)
    out1 = jax.block_until_ready(
        block_resnet_forward(x1, kp_f32, num_layers=NUM_LAYERS, output_dim=OUT_DIM))
    ref1 = reference_forward(x1, params, NUM_LAYERS)
    assert out1.shape == (N1, OUT_DIM), out1.shape
    err1 = float(jnp.max(jnp.abs(out1 - ref1)))
    assert err1 < 1e-4, f"f32 path max abs err {err1}"

    # ---- check 2: bf16 matmul path (v6e/v7x MXU-native), multi-tile grid,
    #      row count not a tile multiple (exercises row padding + slicing) -----
    N2 = 36
    x2 = jax.random.normal(next(ks), (N2, IN_DIM), jnp.float32)
    kp_bf16 = prepare_params(params, NUM_LAYERS, matmul_dtype=jnp.bfloat16)
    out2 = jax.block_until_ready(
        block_resnet_forward(x2, kp_bf16, num_layers=NUM_LAYERS,
                             output_dim=OUT_DIM, tile_n=16))
    ref2 = reference_forward(x2, params, NUM_LAYERS)
    assert out2.shape == (N2, OUT_DIM), out2.shape
    err2 = float(jnp.max(jnp.abs(out2 - ref2)))
    assert err2 < 5e-2, f"bf16 path max abs err {err2}"

    print("KERNEL_OK")
</pallas_src>

<mosaic_0001>
module attributes {stable_mosaic.version = 11 : i64} {
  func.func @kernel(%arg0: i32, %arg1: memref<16x32xf32, #tpu.memory_space<vmem>>, %arg2: memref<32x128xf32, #tpu.memory_space<vmem>>, %arg3: memref<1x128xf32, #tpu.memory_space<vmem>>, %arg4: memref<1x128xf32, #tpu.memory_space<vmem>>, %arg5: memref<1x128xf32, #tpu.memory_space<vmem>>, %arg6: memref<2x128x128xf32, #tpu.memory_space<vmem>>, %arg7: memref<2x128xf32, #tpu.memory_space<vmem>>, %arg8: memref<32x128xf32, #tpu.memory_space<vmem>>, %arg9: memref<1x128xf32, #tpu.memory_space<vmem>>, %arg10: memref<16x128xf32, #tpu.memory_space<vmem>>) attributes {dimension_semantics = [#tpu.dimension_semantics<parallel>], iteration_bounds = array<i64: 1>, scalar_prefetch = 0 : i64, scratch_operands = 0 : i64, tpu.core_type = #tpu.core_type<tc>, window_params = [{transform_indices = @transform_0, window_bounds = array<i64: 16, 32>}, {pipeline_mode = #tpu.pipeline_mode<synchronous>, transform_indices = @transform_1, window_bounds = array<i64: 32, 128>}, {pipeline_mode = #tpu.pipeline_mode<synchronous>, transform_indices = @transform_2, window_bounds = array<i64: 1, 128>}, {pipeline_mode = #tpu.pipeline_mode<synchronous>, transform_indices = @transform_3, window_bounds = array<i64: 1, 128>}, {pipeline_mode = #tpu.pipeline_mode<synchronous>, transform_indices = @transform_4, window_bounds = array<i64: 1, 128>}, {pipeline_mode = #tpu.pipeline_mode<synchronous>, transform_indices = @transform_5, window_bounds = array<i64: 2, 128, 128>}, {pipeline_mode = #tpu.pipeline_mode<synchronous>, transform_indices = @transform_6, window_bounds = array<i64: 2, 128>}, {pipeline_mode = #tpu.pipeline_mode<synchronous>, transform_indices = @transform_7, window_bounds = array<i64: 32, 128>}, {pipeline_mode = #tpu.pipeline_mode<synchronous>, transform_indices = @transform_8, window_bounds = array<i64: 1, 128>}, {transform_indices = @transform_9, window_bounds = array<i64: 16, 128>}]} {
    %c0 = arith.constant 0 : index
    %c0_0 = arith.constant 0 : index
    %0 = vector.load %arg1[%c0, %c0_0] : memref<16x32xf32, #tpu.memory_space<vmem>>, vector<16x32xf32>
    %c0_1 = arith.constant 0 : index
    %c0_2 = arith.constant 0 : index
    %1 = vector.load %arg2[%c0_1, %c0_2] : memref<32x128xf32, #tpu.memory_space<vmem>>, vector<32x128xf32>
    %cst = arith.constant dense<0.000000e+00> : vector<16x128xf32>
    %2 = tpu.matmul %0, %1, %cst {dimension_numbers = #tpu.dot_dimension_numbers<[1], [0], [0], [1], [0, 0, 1, 1], [], []>} : vector<16x32xf32>, vector<32x128xf32>, vector<16x128xf32> -> vector<16x128xf32>
    %c0_3 = arith.constant 0 : index
    %c0_4 = arith.constant 0 : index
    %3 = vector.load %arg3[%c0_3, %c0_4] : memref<1x128xf32, #tpu.memory_space<vmem>>, vector<1x128xf32>
    %4 = vector.broadcast %3 : vector<1x128xf32> to vector<16x128xf32>
    %5 = arith.addf %2, %4 : vector<16x128xf32>
    %c0_5 = arith.constant 0 : index
    %c0_6 = arith.constant 0 : index
    %6 = vector.load %arg4[%c0_5, %c0_6] : memref<1x128xf32, #tpu.memory_space<vmem>>, vector<1x128xf32>
    %c0_7 = arith.constant 0 : index
    %c0_8 = arith.constant 0 : index
    %7 = vector.load %arg5[%c0_7, %c0_8] : memref<1x128xf32, #tpu.memory_space<vmem>>, vector<1x128xf32>
    %8 = vector.broadcast %7 : vector<1x128xf32> to vector<16x128xf32>
    %9 = arith.mulf %8, %5 : vector<16x128xf32>
    %cst_9 = arith.constant 5.000000e-01 : f32
    %10 = vector.broadcast %cst_9 : f32 to vector<16x128xf32>
    %11 = arith.mulf %10, %9 : vector<16x128xf32>
    %12 = math.tanh %11 : vector<16x128xf32>
    %cst_10 = arith.constant 1.000000e+00 : f32
    %13 = vector.broadcast %cst_10 : f32 to vector<16x128xf32>
    %14 = arith.addf %12, %13 : vector<16x128xf32>
    %cst_11 = arith.constant 5.000000e-01 : f32
    %15 = vector.broadcast %cst_11 : f32 to vector<16x128xf32>
    %16 = arith.mulf %15, %14 : vector<16x128xf32>
    %cst_12 = arith.constant 1.000000e+00 : f32
    %17 = vector.broadcast %cst_12 : f32 to vector<1x128xf32>
    %18 = arith.subf %17, %6 : vector<1x128xf32>
    %19 = vector.broadcast %18 : vector<1x128xf32> to vector<16x128xf32>
    %20 = arith.mulf %16, %19 : vector<16x128xf32>
    %21 = vector.broadcast %6 : vector<1x128xf32> to vector<16x128xf32>
    %22 = arith.addf %21, %20 : vector<16x128xf32>
    %23 = arith.mulf %22, %5 : vector<16x128xf32>
    %c0_13 = arith.constant 0 : index
    %c0_14 = arith.constant 0 : index
    %c0_15 = arith.constant 0 : index
    %24 = vector.load %arg6[%c0_13, %c0_14, %c0_15] : memref<2x128x128xf32, #tpu.memory_space<vmem>>, vector<1x128x128xf32>
    %25 = vector.shape_cast %24 : vector<1x128x128xf32> to vector<128x128xf32>
    %cst_16 = arith.constant dense<0.000000e+00> : vector<16x128xf32>
    %26 = tpu.matmul %23, %25, %cst_16 {dimension_numbers = #tpu.dot_dimension_numbers<[1], [0], [0], [1], [0, 0, 1, 1], [], []>} : vector<16x128xf32>, vector<128x128xf32>, vector<16x128xf32> -> vector<16x128xf32>
    %c0_17 = arith.constant 0 : index
    %c0_18 = arith.constant 0 : index
    %27 = vector.load %arg7[%c0_17, %c0_18] : memref<2x128xf32, #tpu.memory_space<vmem>>, vector<1x128xf32>
    %28 = vector.broadcast %27 : vector<1x128xf32> to vector<16x128xf32>
    %29 = arith.addf %26, %28 : vector<16x128xf32>
    %c1 = arith.constant 1 : index
    %c0_19 = arith.constant 0 : index
    %c0_20 = arith.constant 0 : index
    %30 = vector.load %arg6[%c1, %c0_19, %c0_20] : memref<2x128x128xf32, #tpu.memory_space<vmem>>, vector<1x128x128xf32>
    %31 = vector.shape_cast %30 : vector<1x128x128xf32> to vector<128x128xf32>
    %cst_21 = arith.constant dense<0.000000e+00> : vector<16x128xf32>
    %32 = tpu.matmul %29, %31, %cst_21 {dimension_numbers = #tpu.dot_dimension_numbers<[1], [0], [0], [1], [0, 0, 1, 1], [], []>} : vector<16x128xf32>, vector<128x128xf32>, vector<16x128xf32> -> vector<16x128xf32>
    %c1_22 = arith.constant 1 : index
    %c0_23 = arith.constant 0 : index
    %33 = vector.load %arg7[%c1_22, %c0_23] : memref<2x128xf32, #tpu.memory_space<vmem>>, vector<1x128xf32>
    %34 = vector.broadcast %33 : vector<1x128xf32> to vector<16x128xf32>
    %35 = arith.addf %32, %34 : vector<16x128xf32>
    %c0_24 = arith.constant 0 : index
    %c0_25 = arith.constant 0 : index
    %36 = vector.load %arg8[%c0_24, %c0_25] : memref<32x128xf32, #tpu.memory_space<vmem>>, vector<32x128xf32>
    %cst_26 = arith.constant dense<0.000000e+00> : vector<16x128xf32>
    %37 = tpu.matmul %0, %36, %cst_26 {dimension_numbers = #tpu.dot_dimension_numbers<[1], [0], [0], [1], [0, 0, 1, 1], [], []>} : vector<16x32xf32>, vector<32x128xf32>, vector<16x128xf32> -> vector<16x128xf32>
    %c0_27 = arith.constant 0 : index
    %c0_28 = arith.constant 0 : index
    %38 = vector.load %arg9[%c0_27, %c0_28] : memref<1x128xf32, #tpu.memory_space<vmem>>, vector<1x128xf32>
    %39 = vector.broadcast %38 : vector<1x128xf32> to vector<16x128xf32>
    %40 = arith.addf %37, %39 : vector<16x128xf32>
    %41 = arith.addf %35, %40 : vector<16x128xf32>
    %c0_29 = arith.constant 0 : index
    %c0_30 = arith.constant 0 : index
    %42 = vector.load %arg10[%c0_29, %c0_30] : memref<16x128xf32, #tpu.memory_space<vmem>>, vector<16x128xf32>
    tpu.vector_store %arg10[%c0_29, %c0_30], %41 {strides = array<i32>} : memref<16x128xf32, #tpu.memory_space<vmem>>, vector<16x128xf32>,
    return
  }
  func.func @transform_0(%arg0: i32) -> (i32, i32) {
    %c0_i32 = arith.constant 0 : i32
    %c0_i32_0 = arith.constant 0 : i32
    return %arg0, %c0_i32 : i32, i32
  }
  func.func @transform_1(%arg0: i32) -> (i32, i32) {
    %c0_i32 = arith.constant 0 : i32
    %c0_i32_0 = arith.constant 0 : i32
    %c0_i32_1 = arith.constant 0 : i32
    return %c0_i32, %c0_i32_0 : i32, i32
  }
  func.func @transform_2(%arg0: i32) -> (i32, i32) {
    %c0_i32 = arith.constant 0 : i32
    %c0_i32_0 = arith.constant 0 : i32
    %c0_i32_1 = arith.constant 0 : i32
    return %c0_i32, %c0_i32_0 : i32, i32
  }
  func.func @transform_3(%arg0: i32) -> (i32, i32) {
    %c0_i32 = arith.constant 0 : i32
    %c0_i32_0 = arith.constant 0 : i32
    %c0_i32_1 = arith.constant 0 : i32
    return %c0_i32, %c0_i32_0 : i32, i32
  }
  func.func @transform_4(%arg0: i32) -> (i32, i32) {
    %c0_i32 = arith.constant 0 : i32
    %c0_i32_0 = arith.constant 0 : i32
    %c0_i32_1 = arith.constant 0 : i32
    return %c0_i32, %c0_i32_0 : i32, i32
  }
  func.func @transform_5(%arg0: i32) -> (i32, i32, i32) {
    %c0_i32 = arith.constant 0 : i32
    %c0_i32_0 = arith.constant 0 : i32
    %c0_i32_1 = arith.constant 0 : i32
    %c0_i32_2 = arith.constant 0 : i32
    return %c0_i32, %c0_i32_0, %c0_i32_1 : i32, i32, i32
  }
  func.func @transform_6(%arg0: i32) -> (i32, i32) {
    %c0_i32 = arith.constant 0 : i32
    %c0_i32_0 = arith.constant 0 : i32
    %c0_i32_1 = arith.constant 0 : i32
    return %c0_i32, %c0_i32_0 : i32, i32
  }
  func.func @transform_7(%arg0: i32) -> (i32, i32) {
    %c0_i32 = arith.constant 0 : i32
    %c0_i32_0 = arith.constant 0 : i32
    %c0_i32_1 = arith.constant 0 : i32
    return %c0_i32, %c0_i32_0 : i32, i32
  }
  func.func @transform_8(%arg0: i32) -> (i32, i32) {
    %c0_i32 = arith.constant 0 : i32
    %c0_i32_0 = arith.constant 0 : i32
    %c0_i32_1 = arith.constant 0 : i32
    return %c0_i32, %c0_i32_0 : i32, i32
  }
  func.func @transform_9(%arg0: i32) -> (i32, i32) {
    %c0_i32 = arith.constant 0 : i32
    %c0_i32_0 = arith.constant 0 : i32
    return %arg0, %c0_i32 : i32, i32
  }
}

</mosaic_0001>

<llo_original>
// kernel: block_resnet_forward.1
$region0: #{block_resnet_forward.1}
  #allocation0 [shape = 'u32[]', space=smem, size = 0x4, offset = 0x4, fixed_abs, tag = 'smem constant byte address 0x4 - core index']
  #allocation1 [shape = 'u32[144,128]{1,0:T(1,128)}', space=vmem, size = 0x12000, scoped, tag = 'internal scratch']
  %s0 = inlined_call_operand.hbm [shape: f32[16,32], index: 0, kind: input, shape index: {}]
  %s1 = inlined_call_operand.hbm [shape: f32[32,128], index: 1, kind: input, shape index: {}]
  %s2 = inlined_call_operand.vmem [shape: f32[1,128], index: 2, kind: input, shape index: {}]
  %s3 = inlined_call_operand.vmem [shape: f32[1,128], index: 3, kind: input, shape index: {}]
  %s4 = inlined_call_operand.hbm [shape: f32[1,128], index: 4, kind: input, shape index: {}]
  %s5 = inlined_call_operand.hbm [shape: f32[2,128,128], index: 5, kind: input, shape index: {}]
  %s6 = inlined_call_operand.vmem [shape: f32[2,128], index: 6, kind: input, shape index: {}]
  %s7 = inlined_call_operand.hbm [shape: f32[32,128], index: 7, kind: input, shape index: {}]
  %s8 = inlined_call_operand.vmem [shape: f32[1,128], index: 8, kind: input, shape index: {}]
  %s9 = inlined_call_operand.hbm [shape: f32[16,128], index: 9, kind: output, shape index: {}]
  %s10 = sld [smem:[#allocation0]]
  $region66: #{block_resnet_forward.1} parent=0
    _
  %s12 = ssub.s32 1, %s10
  %s13 = scalar_select 0, %s12, %s10
  $region1: #{block_resnet_forward.1} parent=0
    #allocation2 [shape = 'u8[8192]{0}', space=vmem, size = 0x2000, scoped, tag = 'input window, operand 0, single buffered']
    #allocation3 [shape = 's32[1]{0}', space=sflag, size = 0x4, scoped, tag = 'scoped memory for block_resnet_forward.1']
    #allocation4 [shape = 's32[1]{0}', space=sflag, size = 0x4, scoped, tag = 'scoped memory for block_resnet_forward.1']
    #allocation5 [shape = 'u8[16384]{0}', space=vmem, size = 0x4000, scoped, tag = 'input window, operand 1, single buffered']
    #allocation6 [shape = 's32[1]{0}', space=sflag, size = 0x4, scoped, tag = 'scoped memory for block_resnet_forward.1']
    #allocation7 [shape = 'u8[512]{0}', space=vmem, size = 0x400, scoped, tag = 'input window, operand 4, single buffered']
    #allocation8 [shape = 'u8[131072]{0}', space=vmem, size = 0x20000, scoped, tag = 'input window, operand 5, single buffered']
    #allocation9 [shape = 's32[1]{0}', space=sflag, size = 0x4, scoped, tag = 'scoped memory for block_resnet_forward.1']
    #allocation10 [shape = 'u8[16384]{0}', space=vmem, size = 0x4000, scoped, tag = 'input window, operand 7, single buffered']
    #allocation11 [shape = 'u8[8192]{0}', space=vmem, size = 0x2000, scoped, tag = 'output window, operand 0, single buffered']
    %14 = vsyncpa [#allocation3], 0
    %15 = vsyncpa [#allocation6], 0
    %16 = vsyncpa [#allocation9], 0
    %17 = vsyncpa [#allocation4], 0
    // Predicated region
    $region2: #{block_resnet_forward.1} parent=1 // pred_check
      _
    $region3: #{block_resnet_forward.1} parent=1 // pred_check_branch
      %19 = sbr.rel (0) target = $region5
    $region4: #{block_resnet_forward.1} parent=1 // pred_region
      %s21 = ssub.s32 256, 256
      %22 = vsyncadd [#allocation3], %s21
      %s23 = sshll.u32 [#allocation2], 4
      %s24 = int_to_ptr.vmem [resolvable:$true] %s23
      %29 = dma.hbm_to_vmem [thread:$0]  %s0, 256, %s24, [#allocation3], 128, 128, 8
    $region5: #{block_resnet_forward.1} parent=1 // pred_fallthru
      _
    // Predicated region
    $region6: #{block_resnet_forward.1} parent=1 // pred_check
      _
    $region7: #{block_resnet_forward.1} parent=1 // pred_check_branch
      %31 = sbr.rel (0) target = $region9
    $region8: #{block_resnet_forward.1} parent=1 // pred_region
      %s33 = ssub.s32 512, 512
      %34 = vsyncadd [#allocation6], %s33
      %s35 = sshll.u32 [#allocation5], 4
      %s36 = int_to_ptr.vmem [resolvable:$true] %s35
      %41 = dma.hbm_to_vmem [thread:$0]  %s1, 512, %s36, [#allocation6], 128, 128, 8
    $region9: #{block_resnet_forward.1} parent=1 // pred_fallthru
      _
    // Predicated region
    $region10: #{block_resnet_forward.1} parent=1 // pred_check
      _
    $region11: #{block_resnet_forward.1} parent=1 // pred_check_branch
      %43 = sbr.rel (0) target = $region13
    $region12: #{block_resnet_forward.1} parent=1 // pred_region
      _
    $region13: #{block_resnet_forward.1} parent=1 // pred_fallthru
      _
    // Predicated region
    $region14: #{block_resnet_forward.1} parent=1 // pred_check
      _
    $region15: #{block_resnet_forward.1} parent=1 // pred_check_branch
      %45 = sbr.rel (0) target = $region17
    $region16: #{block_resnet_forward.1} parent=1 // pred_region
      _
    $region17: #{block_resnet_forward.1} parent=1 // pred_fallthru
      _
    // Predicated region
    $region18: #{block_resnet_forward.1} parent=1 // pred_check
      _
    $region19: #{block_resnet_forward.1} parent=1 // pred_check_branch
      %47 = sbr.rel (0) target = $region21
    $region20: #{block_resnet_forward.1} parent=1 // pred_region
      %s49 = ssub.s32 16, 16
      %50 = vsyncadd [#allocation6], %s49
      %s52 = sshll.u32 [#allocation7], 4
      %s53 = int_to_ptr.vmem [resolvable:$true] %s52
      %55 = dma.hbm_to_vmem [thread:$0]  %s4, 16, %s53, [#allocation6]
    $region21: #{block_resnet_forward.1} parent=1 // pred_fallthru
      _
    // Predicated region
    $region22: #{block_resnet_forward.1} parent=1 // pred_check
      _
    $region23: #{block_resnet_forward.1} parent=1 // pred_check_branch
      %57 = sbr.rel (0) target = $region25
    $region24: #{block_resnet_forward.1} parent=1 // pred_region
      %s59 = ssub.s32 4096, 4096
      %60 = vsyncadd [#allocation9], %s59
      %s61 = sshll.u32 [#allocation8], 4
      %s62 = int_to_ptr.vmem [resolvable:$true] %s61
      %67 = dma.hbm_to_vmem [thread:$0]  %s5, 4096, %s62, [#allocation9], 128, 128, 8
    $region25: #{block_resnet_forward.1} parent=1 // pred_fallthru
      _
    // Predicated region
    $region26: #{block_resnet_forward.1} parent=1 // pred_check
      _
    $region27: #{block_resnet_forward.1} parent=1 // pred_check_branch
      %69 = sbr.rel (0) target = $region29
    $region28: #{block_resnet_forward.1} parent=1 // pred_region
      _
    $region29: #{block_resnet_forward.1} parent=1 // pred_fallthru
      _
    // Predicated region
    $region30: #{block_resnet_forward.1} parent=1 // pred_check
      _
    $region31: #{block_resnet_forward.1} parent=1 // pred_check_branch
      %71 = sbr.rel (0) target = $region33
    $region32: #{block_resnet_forward.1} parent=1 // pred_region
      %s73 = ssub.s32 512, 512
      %74 = vsyncadd [#allocation9], %s73
      %s75 = sshll.u32 [#allocation10], 4
      %s76 = int_to_ptr.vmem [resolvable:$true] %s75
      %81 = dma.hbm_to_vmem [thread:$0]  %s7, 512, %s76, [#allocation9], 128, 128, 8
    $region33: #{block_resnet_forward.1} parent=1 // pred_fallthru
      _
    // Predicated region
    $region34: #{block_resnet_forward.1} parent=1 // pred_check
      _
    $region35: #{block_resnet_forward.1} parent=1 // pred_check_branch
      %83 = sbr.rel (0) target = $region37
    $region36: #{block_resnet_forward.1} parent=1 // pred_region
      _
    $region37: #{block_resnet_forward.1} parent=1 // pred_fallthru
      _
    // Predicated region
    $region38: #{block_resnet_forward.1} parent=1 // pred_check
      _
    $region39: #{block_resnet_forward.1} parent=1 // pred_check_branch
      %85 = sbr.rel (0) target = $region41
    $region40: #{block_resnet_forward.1} parent=1 // pred_region
      %86 = dma.done [#allocation3], 256
    $region41: #{block_resnet_forward.1} parent=1 // pred_fallthru
      _
    // Predicated region
    $region42: #{block_resnet_forward.1} parent=1 // pred_check
      _
    $region43: #{block_resnet_forward.1} parent=1 // pred_check_branch
      %88 = sbr.rel (0) target = $region45
    $region44: #{block_resnet_forward.1} parent=1 // pred_region
      %89 = dma.done [#allocation6], 512
    $region45: #{block_resnet_forward.1} parent=1 // pred_fallthru
      _
    // Predicated region
    $region46: #{block_resnet_forward.1} parent=1 // pred_check
      _
    $region47: #{block_resnet_forward.1} parent=1 // pred_check_branch
      %91 = sbr.rel (0) target = $region49
    $region48: #{block_resnet_forward.1} parent=1 // pred_region
      %92 = dma.done [#allocation6], 16
    $region49: #{block_resnet_forward.1} parent=1 // pred_fallthru
      _
    // Predicated region
    $region50: #{block_resnet_forward.1} parent=1 // pred_check
      _
    $region51: #{block_resnet_forward.1} parent=1 // pred_check_branch
      %94 = sbr.rel (0) target = $region53
    $region52: #{block_resnet_forward.1} parent=1 // pred_region
      %95 = dma.done [#allocation9], 4096
    $region53: #{block_resnet_forward.1} parent=1 // pred_fallthru
      _
    // Predicated region
    $region54: #{block_resnet_forward.1} parent=1 // pred_check
      _
    $region55: #{block_resnet_forward.1} parent=1 // pred_check_branch
      %97 = sbr.rel (0) target = $region57
    $region56: #{block_resnet_forward.1} parent=1 // pred_region
      %98 = dma.done [#allocation9], 512
    $region57: #{block_resnet_forward.1} parent=1 // pred_fallthru
      _
    %v99 = vld [vmem:[#allocation2] sm:$0xff]
    %v100 = vld [vmem:[#allocation2 + $0x8] sm:$0xff]
    %v101 = vld [vmem:[#allocation5] sm:$0xff]
    %v102 = vld [vmem:[#allocation5 + $0x8] sm:$0xff]
    %v103 = vld [vmem:[#allocation5 + $0x10] sm:$0xff]
    %v104 = vld [vmem:[#allocation5 + $0x18] sm:$0xff]
    %v105 = vld [vmem:[%s2] sm:$0x1]
    %v107 = vlaneseq
    %v108 = vshrl.u32 %v107, 7
    %v109 = vsub.s32 0, %v108
    %v110 = vrot.slane %v105, %v109
    %vm112 = vcmask 261120
    %v114 = vsel %vm112, %v99, 0
    %v117 = vsel %vm112, %v100, 0
    %119 = vmatprep.subr.mxu0 0.0
    %120 = vmatpush1.msra.mxu0 %v101
    %121 = vmatprep.subr.mxu0 0.0
    %122 = vmatpush1.msra.mxu0 %v102
    %123 = vmatprep.subr.mxu0 0.0
    %124 = vmatpush1.msra.mxu0 %v103
    %125 = vmatprep.subr.mxu0 0.0
    %126 = vmatpush1.msra.mxu0 %v104
    %127 = vmatprep.subr.mxu0 0.0
    %128 = vmatpush1.msra.mxu0 0.0
    %129 = vmatprep.subr.mxu0 0.0
    %130 = vmatpush1.msra.mxu0 0.0
    %131 = vmatprep.subr.mxu0 0.0
    %132 = vmatpush1.msra.mxu0 0.0
    %133 = vmatprep.subr.mxu0 0.0
    %134 = vmatpush1.msra.mxu0 0.0
    %135 = vmatprep.subr.mxu0 0.0
    %136 = vmatpush1.msra.mxu0 0.0
    %137 = vmatprep.subr.mxu0 0.0
    %138 = vmatpush1.msra.mxu0 0.0
    %139 = vmatprep.subr.mxu0 0.0
    %140 = vmatpush1.msra.mxu0 0.0
    %141 = vmatprep.subr.mxu0 0.0
    %142 = vmatpush1.msra.mxu0 0.0
    %143 = vmatprep.subr.mxu0 0.0
    %144 = vmatpush1.msra.mxu0 0.0
    %145 = vmatprep.subr.mxu0 0.0
    %146 = vmatpush1.msra.mxu0 0.0
    %147 = vmatprep.subr.mxu0 0.0
    %148 = vmatpush1.msra.mxu0 0.0
    %149 = vmatprep.subr.mxu0 0.0
    %150 = vmatpush1.msra.mxu0 0.0
    %151 = vmatprep.subr.mxu0 0.0
    %152 = vmatpush1.msra.mxu0 0.0
    %153 = vmatprep.subr.mxu0 0.0
    %154 = vmatpush1.msra.mxu0 0.0
    %155 = vmatprep.subr.mxu0 0.0
    %156 = vmatpush1.msra.mxu0 0.0
    %157 = vmatprep.subr.mxu0 0.0
    %158 = vmatpush1.msra.mxu0 0.0
    %159 = vmatprep.subr.mxu0 0.0
    %160 = vmatpush1.msra.mxu0 0.0
    %161 = vmatprep.subr.mxu0 0.0
    %162 = vmatpush1.msra.mxu0 0.0
    %163 = vmatprep.subr.mxu0 0.0
    %164 = vmatpush1.msra.mxu0 0.0
    %165 = vmatprep.subr.mxu0 0.0
    %166 = vmatpush1.msra.mxu0 0.0
    %167 = vmatprep.subr.mxu0 0.0
    %168 = vmatpush1.msra.mxu0 0.0
    %169 = vmatprep.subr.mxu0 0.0
    %170 = vmatpush1.msra.mxu0 0.0
    %171 = vmatprep.subr.mxu0 0.0
    %172 = vmatpush1.msra.mxu0 0.0
    %173 = vmatprep.subr.mxu0 0.0
    %174 = vmatpush1.msra.mxu0 0.0
    %175 = vmatprep.subr.mxu0 0.0
    %176 = vmatpush1.msra.mxu0 0.0
    %177 = vmatprep.subr.mxu0 0.0
    %178 = vmatpush1.msra.mxu0 0.0
    %179 = vmatprep.subr.mxu0 0.0
    %180 = vmatpush1.msra.mxu0 0.0
    %181 = vmatprep.subr.mxu0 0.0
    %182 = vmatpush1.msra.mxu0 0.0
    %183 = vmatprep.mubr.f32.mxu0 0.0
    %184 = vmatmul.mubr.f32.gmra.mrb[0].mxu0 %v114
    %v185 = vpop.f32.mrb[0].mxu0
    %v186 = vadd.f32 %v110, %v185
    %v187 = vpop.f32.mrb[0].mxu0
    %188 = vmatprep.mubr.f32.mxu0 0.0
    %189 = vmatmul.mubr.f32.gmra.mrb[0].mxu0 %v117
    %v190 = vpop.f32.mrb[0].mxu0
    %v191 = vadd.f32 %v110, %v190
    %v192 = vpop.f32.mrb[0].mxu0
    %193 = vdwg.mxu0
    %v194 = vld [vmem:[%s3] sm:$0x1]
    %v195 = vld [vmem:[#allocation7] sm:$0x1]
    %v197 = vlaneseq
    %v198 = vshrl.u32 %v197, 7
    %v199 = vsub.s32 0, %v198
    %v200 = vrot.slane %v195, %v199
    %v202 = vmul.f32 %v200, %v186
    %v203 = vmul.f32 %v200, %v191
    %v204 = vmul.f32 %v202, 0.5
    %v205 = vmul.f32 %v203, 0.5
    %v206 = vtanh.pop %v204
    %v207 = vtanh.pop %v205
    %v208 = vadd.f32 %v206, 1.0
    %v209 = vadd.f32 %v207, 1.0
    %v210 = vmul.f32 %v208, 0.5
    %v211 = vmul.f32 %v209, 0.5
    %v212 = vsub.f32 1.0, %v194
    %v214 = vlaneseq
    %v215 = vshrl.u32 %v214, 7
    %v216 = vsub.s32 0, %v215
    %v217 = vrot.slane %v212, %v216
    %v219 = vmul.f32 %v210, %v217
    %v220 = vmul.f32 %v211, %v217
    %v222 = vlaneseq
    %v223 = vshrl.u32 %v222, 7
    %v224 = vsub.s32 0, %v223
    %v225 = vrot.slane %v194, %v224
    %v227 = vadd.f32 %v225, %v219
    %v228 = vadd.f32 %v225, %v220
    %v229 = vmul.f32 %v227, %v186
    %v230 = vmul.f32 %v228, %v191
    %v231 = vld [vmem:[#allocation8] sm:$0xff]
    %v232 = vld [vmem:[#allocation8 + $0x8] sm:$0xff]
    %v233 = vld [vmem:[#allocation8 + $0x10] sm:$0xff]
    %v234 = vld [vmem:[#allocation8 + $0x18] sm:$0xff]
    %v235 = vld [vmem:[#allocation8 + $0x20] sm:$0xff]
    %v236 = vld [vmem:[#allocation8 + $0x28] sm:$0xff]
    %v237 = vld [vmem:[#allocation8 + $0x30] sm:$0xff]
    %v238 = vld [vmem:[#allocation8 + $0x38] sm:$0xff]
    %v239 = vld [vmem:[#allocation8 + $0x40] sm:$0xff]
    %v240 = vld [vmem:[#allocation8 + $0x48] sm:$0xff]
    %v241 = vld [vmem:[#allocation8 + $0x50] sm:$0xff]
    %v242 = vld [vmem:[#allocation8 + $0x58] sm:$0xff]
    %v243 = vld [vmem:[#allocation8 + $0x60] sm:$0xff]
    %v244 = vld [vmem:[#allocation8 + $0x68] sm:$0xff]
    %v245 = vld [vmem:[#allocation8 + $0x70] sm:$0xff]
    %v246 = vld [vmem:[#allocation8 + $0x78] sm:$0xff]
    %v247 = vld [vmem:[%s6] sm:$0x1]
    %v248 = vlaneseq
    %v249 = vshrl.u32 %v248, 7
    %v250 = vsub.s32 0, %v249
    %v251 = vrot.slane %v247, %v250
    %252 = vmatprep.subr.mxu0 0.0
    %253 = vmatpush1.msra.mxu0 %v231
    %254 = vmatprep.subr.mxu0 0.0
    %255 = vmatpush1.msra.mxu0 %v232
    %256 = vmatprep.subr.mxu0 0.0
    %257 = vmatpush1.msra.mxu0 %v233
    %258 = vmatprep.subr.mxu0 0.0
    %259 = vmatpush1.msra.mxu0 %v234
    %260 = vmatprep.subr.mxu0 0.0
    %261 = vmatpush1.msra.mxu0 %v235
    %262 = vmatprep.subr.mxu0 0.0
    %263 = vmatpush1.msra.mxu0 %v236
    %264 = vmatprep.subr.mxu0 0.0
    %265 = vmatpush1.msra.mxu0 %v237
    %266 = vmatprep.subr.mxu0 0.0
    %267 = vmatpush1.msra.mxu0 %v238
    %268 = vmatprep.subr.mxu0 0.0
    %269 = vmatpush1.msra.mxu0 %v239
    %270 = vmatprep.subr.mxu0 0.0
    %271 = vmatpush1.msra.mxu0 %v240
    %272 = vmatprep.subr.mxu0 0.0
    %273 = vmatpush1.msra.mxu0 %v241
    %274 = vmatprep.subr.mxu0 0.0
    %275 = vmatpush1.msra.mxu0 %v242
    %276 = vmatprep.subr.mxu0 0.0
    %277 = vmatpush1.msra.mxu0 %v243
    %278 = vmatprep.subr.mxu0 0.0
    %279 = vmatpush1.msra.mxu0 %v244
    %280 = vmatprep.subr.mxu0 0.0
    %281 = vmatpush1.msra.mxu0 %v245
    %282 = vmatprep.subr.mxu0 0.0
    %283 = vmatpush1.msra.mxu0 %v246
    %284 = vmatprep.subr.mxu0 0.0
    %285 = vmatpush1.msra.mxu0 0.0
    %286 = vmatprep.subr.mxu0 0.0
    %287 = vmatpush1.msra.mxu0 0.0
    %288 = vmatprep.subr.mxu0 0.0
    %289 = vmatpush1.msra.mxu0 0.0
    %290 = vmatprep.subr.mxu0 0.0
    %291 = vmatpush1.msra.mxu0 0.0
    %292 = vmatprep.subr.mxu0 0.0
    %293 = vmatpush1.msra.mxu0 0.0
    %294 = vmatprep.subr.mxu0 0.0
    %295 = vmatpush1.msra.mxu0 0.0
    %296 = vmatprep.subr.mxu0 0.0
    %297 = vmatpush1.msra.mxu0 0.0
    %298 = vmatprep.subr.mxu0 0.0
    %299 = vmatpush1.msra.mxu0 0.0
    %300 = vmatprep.subr.mxu0 0.0
    %301 = vmatpush1.msra.mxu0 0.0
    %302 = vmatprep.subr.mxu0 0.0
    %303 = vmatpush1.msra.mxu0 0.0
    %304 = vmatprep.subr.mxu0 0.0
    %305 = vmatpush1.msra.mxu0 0.0
    %306 = vmatprep.subr.mxu0 0.0
    %307 = vmatpush1.msra.mxu0 0.0
    %308 = vmatprep.subr.mxu0 0.0
    %309 = vmatpush1.msra.mxu0 0.0
    %310 = vmatprep.subr.mxu0 0.0
    %311 = vmatpush1.msra.mxu0 0.0
    %312 = vmatprep.subr.mxu0 0.0
    %313 = vmatpush1.msra.mxu0 0.0
    %314 = vmatprep.subr.mxu0 0.0
    %315 = vmatpush1.msra.mxu0 0.0
    %316 = vmatprep.mubr.f32.mxu0 0.0
    %317 = vmatmul.mubr.f32.gmra.mrb[0].mxu0 %v229
    %v318 = vpop.f32.mrb[0].mxu0
    %v319 = vadd.f32 %v251, %v318
    %v320 = vpop.f32.mrb[0].mxu0
    %321 = vmatprep.mubr.f32.mxu0 0.0
    %322 = vmatmul.mubr.f32.gmra.mrb[0].mxu0 %v230
    %v323 = vpop.f32.mrb[0].mxu0
    %v324 = vadd.f32 %v251, %v323
    %v325 = vpop.f32.mrb[0].mxu0
    %326 = vdwg.mxu0
    %s327 = scalar_lea.vmem [#allocation8], 128
    %v328 = vld [vmem:[%s327] sm:$0xff]
    %v329 = vld [vmem:[%s327 + $0x8] sm:$0xff]
    %v330 = vld [vmem:[%s327 + $0x10] sm:$0xff]
    %v331 = vld [vmem:[%s327 + $0x18] sm:$0xff]
    %v332 = vld [vmem:[%s327 + $0x20] sm:$0xff]
    %v333 = vld [vmem:[%s327 + $0x28] sm:$0xff]
    %v334 = vld [vmem:[%s327 + $0x30] sm:$0xff]
    %v335 = vld [vmem:[%s327 + $0x38] sm:$0xff]
    %v336 = vld [vmem:[%s327 + $0x40] sm:$0xff]
    %v337 = vld [vmem:[%s327 + $0x48] sm:$0xff]
    %v338 = vld [vmem:[%s327 + $0x50] sm:$0xff]
    %v339 = vld [vmem:[%s327 + $0x58] sm:$0xff]
    %v340 = vld [vmem:[%s327 + $0x60] sm:$0xff]
    %v341 = vld [vmem:[%s327 + $0x68] sm:$0xff]
    %v342 = vld [vmem:[%s327 + $0x70] sm:$0xff]
    %v343 = vld [vmem:[%s327 + $0x78] sm:$0xff]
    %v344 = vld [vmem:[%s6 + $0x1] sm:$0x1]
    %v345 = vlaneseq
    %v346 = vshrl.u32 %v345, 7
    %v347 = vsub.s32 0, %v346
    %v348 = vrot.slane %v344, %v347
    %349 = vmatprep.subr.mxu0 0.0
    %350 = vmatpush1.msra.mxu0 %v328
    %351 = vmatprep.subr.mxu0 0.0
    %352 = vmatpush1.msra.mxu0 %v329
    %353 = vmatprep.subr.mxu0 0.0
    %354 = vmatpush1.msra.mxu0 %v330
    %355 = vmatprep.subr.mxu0 0.0
    %356 = vmatpush1.msra.mxu0 %v331
    %357 = vmatprep.subr.mxu0 0.0
    %358 = vmatpush1.msra.mxu0 %v332
    %359 = vmatprep.subr.mxu0 0.0
    %360 = vmatpush1.msra.mxu0 %v333
    %361 = vmatprep.subr.mxu0 0.0
    %362 = vmatpush1.msra.mxu0 %v334
    %363 = vmatprep.subr.mxu0 0.0
    %364 = vmatpush1.msra.mxu0 %v335
    %365 = vmatprep.subr.mxu0 0.0
    %366 = vmatpush1.msra.mxu0 %v336
    %367 = vmatprep.subr.mxu0 0.0
    %368 = vmatpush1.msra.mxu0 %v337
    %369 = vmatprep.subr.mxu0 0.0
    %370 = vmatpush1.msra.mxu0 %v338
    %371 = vmatprep.subr.mxu0 0.0
    %372 = vmatpush1.msra.mxu0 %v339
    %373 = vmatprep.subr.mxu0 0.0
    %374 = vmatpush1.msra.mxu0 %v340
    %375 = vmatprep.subr.mxu0 0.0
    %376 = vmatpush1.msra.mxu0 %v341
    %377 = vmatprep.subr.mxu0 0.0
    %378 = vmatpush1.msra.mxu0 %v342
    %379 = vmatprep.subr.mxu0 0.0
    %380 = vmatpush1.msra.mxu0 %v343
    %381 = vmatprep.subr.mxu0 0.0
    %382 = vmatpush1.msra.mxu0 0.0
    %383 = vmatprep.subr.mxu0 0.0
    %384 = vmatpush1.msra.mxu0 0.0
    %385 = vmatprep.subr.mxu0 0.0
    %386 = vmatpush1.msra.mxu0 0.0
    %387 = vmatprep.subr.mxu0 0.0
    %388 = vmatpush1.msra.mxu0 0.0
    %389 = vmatprep.subr.mxu0 0.0
    %390 = vmatpush1.msra.mxu0 0.0
    %391 = vmatprep.subr.mxu0 0.0
    %392 = vmatpush1.msra.mxu0 0.0
    %393 = vmatprep.subr.mxu0 0.0
    %394 = vmatpush1.msra.mxu0 0.0
    %395 = vmatprep.subr.mxu0 0.0
    %396 = vmatpush1.msra.mxu0 0.0
    %397 = vmatprep.subr.mxu0 0.0
    %398 = vmatpush1.msra.mxu0 0.0
    %399 = vmatprep.subr.mxu0 0.0
    %400 = vmatpush1.msra.mxu0 0.0
    %401 = vmatprep.subr.mxu0 0.0
    %402 = vmatpush1.msra.mxu0 0.0
    %403 = vmatprep.subr.mxu0 0.0
    %404 = vmatpush1.msra.mxu0 0.0
    %405 = vmatprep.subr.mxu0 0.0
    %406 = vmatpush1.msra.mxu0 0.0
    %407 = vmatprep.subr.mxu0 0.0
    %408 = vmatpush1.msra.mxu0 0.0
    %409 = vmatprep.subr.mxu0 0.0
    %410 = vmatpush1.msra.mxu0 0.0
    %411 = vmatprep.subr.mxu0 0.0
    %412 = vmatpush1.msra.mxu0 0.0
    %413 = vmatprep.mubr.f32.mxu0 0.0
    %414 = vmatmul.mubr.f32.gmra.mrb[0].mxu0 %v319
    %v415 = vpop.f32.mrb[0].mxu0
    %v416 = vadd.f32 %v348, %v415
    %v417 = vpop.f32.mrb[0].mxu0
    %418 = vmatprep.mubr.f32.mxu0 0.0
    %419 = vmatmul.mubr.f32.gmra.mrb[0].mxu0 %v324
    %v420 = vpop.f32.mrb[0].mxu0
    %v421 = vadd.f32 %v348, %v420
    %v422 = vpop.f32.mrb[0].mxu0
    %423 = vdwg.mxu0
    %v424 = vld [vmem:[#allocation10] sm:$0xff]
    %v425 = vld [vmem:[#allocation10 + $0x8] sm:$0xff]
    %v426 = vld [vmem:[#allocation10 + $0x10] sm:$0xff]
    %v427 = vld [vmem:[#allocation10 + $0x18] sm:$0xff]
    %v428 = vld [vmem:[%s8] sm:$0x1]
    %v430 = vlaneseq
    %v431 = vshrl.u32 %v430, 7
    %v432 = vsub.s32 0, %v431
    %v433 = vrot.slane %v428, %v432
    %435 = vmatprep.subr.mxu0 0.0
    %436 = vmatpush1.msra.mxu0 %v424
    %437 = vmatprep.subr.mxu0 0.0
    %438 = vmatpush1.msra.mxu0 %v425
    %439 = vmatprep.subr.mxu0 0.0
    %440 = vmatpush1.msra.mxu0 %v426
    %441 = vmatprep.subr.mxu0 0.0
    %442 = vmatpush1.msra.mxu0 %v427
    %443 = vmatprep.subr.mxu0 0.0
    %444 = vmatpush1.msra.mxu0 0.0
    %445 = vmatprep.subr.mxu0 0.0
    %446 = vmatpush1.msra.mxu0 0.0
    %447 = vmatprep.subr.mxu0 0.0
    %448 = vmatpush1.msra.mxu0 0.0
    %449 = vmatprep.subr.mxu0 0.0
    %450 = vmatpush1.msra.mxu0 0.0
    %451 = vmatprep.subr.mxu0 0.0
    %452 = vmatpush1.msra.mxu0 0.0
    %453 = vmatprep.subr.mxu0 0.0
    %454 = vmatpush1.msra.mxu0 0.0
    %455 = vmatprep.subr.mxu0 0.0
    %456 = vmatpush1.msra.mxu0 0.0
    %457 = vmatprep.subr.mxu0 0.0
    %458 = vmatpush1.msra.mxu0 0.0
    %459 = vmatprep.subr.mxu0 0.0
    %460 = vmatpush1.msra.mxu0 0.0
    %461 = vmatprep.subr.mxu0 0.0
    %462 = vmatpush1.msra.mxu0 0.0
    %463 = vmatprep.subr.mxu0 0.0
    %464 = vmatpush1.msra.mxu0 0.0
    %465 = vmatprep.subr.mxu0 0.0
    %466 = vmatpush1.msra.mxu0 0.0
    %467 = vmatprep.subr.mxu0 0.0
    %468 = vmatpush1.msra.mxu0 0.0
    %469 = vmatprep.subr.mxu0 0.0
    %470 = vmatpush1.msra.mxu0 0.0
    %471 = vmatprep.subr.mxu0 0.0
    %472 = vmatpush1.msra.mxu0 0.0
    %473 = vmatprep.subr.mxu0 0.0
    %474 = vmatpush1.msra.mxu0 0.0
    %475 = vmatprep.subr.mxu0 0.0
    %476 = vmatpush1.msra.mxu0 0.0
    %477 = vmatprep.subr.mxu0 0.0
    %478 = vmatpush1.msra.mxu0 0.0
    %479 = vmatprep.subr.mxu0 0.0
    %480 = vmatpush1.msra.mxu0 0.0
    %481 = vmatprep.subr.mxu0 0.0
    %482 = vmatpush1.msra.mxu0 0.0
    %483 = vmatprep.subr.mxu0 0.0
    %484 = vmatpush1.msra.mxu0 0.0
    %485 = vmatprep.subr.mxu0 0.0
    %486 = vmatpush1.msra.mxu0 0.0
    %487 = vmatprep.subr.mxu0 0.0
    %488 = vmatpush1.msra.mxu0 0.0
    %489 = vmatprep.subr.mxu0 0.0
    %490 = vmatpush1.msra.mxu0 0.0
    %491 = vmatprep.subr.mxu0 0.0
    %492 = vmatpush1.msra.mxu0 0.0
    %493 = vmatprep.subr.mxu0 0.0
    %494 = vmatpush1.msra.mxu0 0.0
    %495 = vmatprep.subr.mxu0 0.0
    %496 = vmatpush1.msra.mxu0 0.0
    %497 = vmatprep.subr.mxu0 0.0
    %498 = vmatpush1.msra.mxu0 0.0
    %499 = vmatprep.mubr.f32.mxu0 0.0
    %500 = vmatmul.mubr.f32.gmra.mrb[0].mxu0 %v114
    %v501 = vpop.f32.mrb[0].mxu0
    %v502 = vadd.f32 %v433, %v501
    %v503 = vpop.f32.mrb[0].mxu0
    %504 = vmatprep.mubr.f32.mxu0 0.0
    %505 = vmatmul.mubr.f32.gmra.mrb[0].mxu0 %v117
    %v506 = vpop.f32.mrb[0].mxu0
    %v507 = vadd.f32 %v433, %v506
    %v508 = vpop.f32.mrb[0].mxu0
    %509 = vdwg.mxu0
    %v510 = vadd.f32 %v416, %v502
    %v511 = vadd.f32 %v421, %v507
    %512 = vst [vmem:[#allocation11] sm:$0xff] %v510
    %513 = vst [vmem:[#allocation11 + $0x8] sm:$0xff] %v511
    // Predicated region
    $region58: #{block_resnet_forward.1} parent=1 // pred_check
      _
    $region59: #{block_resnet_forward.1} parent=1 // pred_check_branch
      %515 = sbr.rel (0) target = $region61
    $region60: #{block_resnet_forward.1} parent=1 // pred_region
      %s517 = ssub.s32 256, 256
      %518 = vsyncadd [#allocation4], %s517
      %s519 = sshll.u32 [#allocation11], 4
      %s520 = int_to_ptr.vmem [resolvable:$true] %s519
      %525 = dma.vmem_to_hbm [thread:$0]  %s520, 256, %s9, [#allocation4], 128, 128, 8
    $region61: #{block_resnet_forward.1} parent=1 // pred_fallthru
      _
    // Predicated region
    $region62: #{block_resnet_forward.1} parent=1 // pred_check
      _
    $region63: #{block_resnet_forward.1} parent=1 // pred_check_branch
      %527 = sbr.rel (0) target = $region65
    $region64: #{block_resnet_forward.1} parent=1 // pred_region
      %528 = dma.done [#allocation4], 256
    $region65: #{block_resnet_forward.1} parent=1 // pred_fallthru
      _
    %529 = vsyncpa [#allocation3], 1
    %530 = vsyncpa [#allocation6], 1
    %531 = vsyncpa [#allocation9], 1
    %532 = vsyncpa [#allocation4], 1

</llo_original>
